<compile_context>
chip_gen: v7x
topology: tpu7x:2x2x1
jax: 0.10.0
libtpu: 0.0.40
codegen_flags: <defaults>
</compile_context>

<pallas_src>
import functools
import math

import jax
import jax.numpy as jnp
from jax.experimental import pallas as pl
from jax.experimental.pallas import tpu as pltpu


def _learnable_sigmoid_kernel(param_ref, x_ref, o_ref, *, beta):
    # param_ref: (1, W)  f32 packed parameter (feature pattern tiled reps times)
    # x_ref    : (tm, W) lane-dense packed input tile
    p = param_ref[...]
    x = x_ref[...].astype(jnp.float32)      # PyTorch promotes to f32 (param is f32)
    z = x * p                               # VPU multiply; (1, W) row broadcast
    e = jnp.exp(-z)                         # transcendental -> EUP slot
    y = 1.0 / (1.0 + e)                     # exact sigmoid; kernel is DMA-bound so an
                                            # approx EUP reciprocal buys no wall-clock
    if beta != 1.0:                         # trace-time check: no dead multiply
        y = beta * y
    o_ref[...] = y.astype(o_ref.dtype)


def _choose_reps(feat, n_frows, max_w=8192, target_w=1024):
    """Pick reps | n_frows so W = reps*feat divides x.size exactly (no padding,
    no extra HBM passes).  Prefer lane-aligned (W % 128 == 0) and wide (>= 512)
    packings; fall back gracefully otherwise."""
    divs = set()
    d = 1
    while d * d <= n_frows:
        if n_frows % d == 0:
            divs.add(d)
            divs.add(n_frows // d)
        d += 1
    best_key, best_r = None, 1
    for r in sorted(divs):
        W = r * feat
        if W > max_w and r != 1:
            continue
        key = (W % 128 == 0, W >= 512, -abs(W - target_w))
        if best_key is None or key > best_key:
            best_key, best_r = key, r
    return best_r


def learnable_sigmoid_1d(x, param, beta=1.0):
    """beta * sigmoid(param * x); param has shape (in_feature,) == x.shape[-1]."""
    orig_shape = x.shape
    feat = orig_shape[-1]
    assert param.shape == (feat,), "param must match the trailing feature dim"

    out_dtype = jnp.result_type(x.dtype, param.dtype)

    if x.size == 0:                                   # degenerate-input early-out
        return jnp.zeros(orig_shape, out_dtype)

    itemsize = jnp.dtype(x.dtype).itemsize
    n_elems = x.size
    n_frows = n_elems // feat                         # number of feature vectors

    # --- Packed width: W = reps*feat with reps | n_frows  =>  rows * W == n_elems.
    reps = _choose_reps(feat, n_frows)
    W = reps * feat
    rows = n_frows // reps
    x2 = x.reshape(rows, W)                           # contiguous reshape: no copy

    # Param repeats every `feat` lanes of the flat element order, so tiling it
    # reps times preserves the exact PyTorch broadcast semantics.  Kept in f32.
    p_packed = jnp.tile(param.astype(jnp.float32), reps).reshape(1, W)

    # --- Row tile: ~4 MiB per buffer.  2 in-bufs + 2 out-bufs + param ~= 16 MiB,
    # inside the 32 MiB scoped VMEM on v5e/v6e and well under v7x's 64 MiB.
    target_tile_bytes = 4 << 20
    if rows <= 8:
        tm = rows                                     # full-extent block is legal
    else:
        tm = max(8, (target_tile_bytes // (W * itemsize)) // 8 * 8)
        # v7x: guarantee >= 2 grid blocks so the "parallel" axis can shard
        # across both TensorCores (harmless on 1-TC v5e/v6e).
        half_rows = ((-(-rows // 2)) + 7) // 8 * 8    # sublane-aligned ceil(rows/2)
        tm = min(tm, half_rows)
    grid = (pl.cdiv(rows, tm),)                       # partial last block handled by Pallas

    cost = pl.CostEstimate(
        flops=3 * n_elems,
        transcendentals=2 * n_elems,                  # exp + reciprocal per element
        bytes_accessed=n_elems * itemsize
        + n_elems * jnp.dtype(out_dtype).itemsize
        + W * 4,
    )

    out2 = pl.pallas_call(
        functools.partial(_learnable_sigmoid_kernel, beta=float(beta)),
        out_shape=jax.ShapeDtypeStruct((rows, W), out_dtype),
        grid_spec=pltpu.PrefetchScalarGridSpec(
            num_scalar_prefetch=0,
            grid=grid,
            in_specs=[
                pl.BlockSpec((1, W), lambda i: (0, 0)),    # packed param (resident)
                pl.BlockSpec((tm, W), lambda i: (i, 0)),   # x row tile
            ],
            out_specs=pl.BlockSpec((tm, W), lambda i: (i, 0)),
        ),
        compiler_params=pltpu.CompilerParams(
            dimension_semantics=("parallel",),             # megacore-shardable
            vmem_limit_bytes=32 << 20,                     # >= 4x tile; safe v5e/v6e/v7x
        ),
        cost_estimate=cost,
    )(p_packed, x2)

    return out2.reshape(orig_shape)                   # rows*W == n_elems: no slicing


if __name__ == "__main__":
    in_feature = 32

    key = jax.random.PRNGKey(0)
    k1, k2, k3, kp = jax.random.split(key, 4)

    fn = jax.jit(learnable_sigmoid_1d, static_argnames=("beta",))

    ok = True

    # 1) Module defaults: param = ones, beta = 1.  Lane-aligned packing
    #    (n_frows = 16 -> W = 512, rows = 1).
    param_ones = jnp.ones((in_feature,), dtype=jnp.float32)
    x1 = jax.random.normal(k1, (2, 8, in_feature), dtype=jnp.float32)
    y1 = jax.block_until_ready(fn(x1, param_ones, beta=1.0))
    ref1 = 1.0 * jax.nn.sigmoid(param_ones * x1)
    ok &= y1.shape == x1.shape and bool(jnp.allclose(y1, ref1, atol=1e-6, rtol=1e-6))

    # 2) Trained-like param, beta != 1; odd leading dims exercise the exact-divisor
    #    (unaligned-width, zero-copy) fallback (W = 1120).
    param_rand = 1.0 + 0.1 * jax.random.normal(kp, (in_feature,), dtype=jnp.float32)
    x2 = jax.random.normal(k2, (5, 7, in_feature), dtype=jnp.float32)
    y2 = jax.block_until_ready(fn(x2, param_rand, beta=0.5))
    ref2 = 0.5 * jax.nn.sigmoid(param_rand * x2)
    ok &= y2.shape == x2.shape and bool(jnp.allclose(y2, ref2, atol=1e-6, rtol=1e-6))

    # 3) Multi-block grid path (rows = 32 -> tm = 16 -> 2 parallel blocks).
    x3 = jax.random.normal(k3, (8, 128, in_feature), dtype=jnp.float32)
    y3 = jax.block_until_ready(fn(x3, param_rand, beta=2.0))
    ref3 = 2.0 * jax.nn.sigmoid(param_rand * x3)
    ok &= y3.shape == x3.shape and bool(jnp.allclose(y3, ref3, atol=1e-6, rtol=1e-6))

    assert ok, "mismatch vs reference"
    print("KERNEL_OK")
</pallas_src>

<mosaic_0001>
module attributes {stable_mosaic.version = 11 : i64} {
  func.func @_learnable_sigmoid_kernel(%arg0: i32, %arg1: memref<1x512xf32, #tpu.memory_space<vmem>>, %arg2: memref<1x512xf32, #tpu.memory_space<vmem>>, %arg3: memref<1x512xf32, #tpu.memory_space<vmem>>) attributes {dimension_semantics = [#tpu.dimension_semantics<parallel>], iteration_bounds = array<i64: 1>, scalar_prefetch = 0 : i64, scratch_operands = 0 : i64, tpu.core_type = #tpu.core_type<tc>, window_params = [{pipeline_mode = #tpu.pipeline_mode<synchronous>, transform_indices = @transform_0, window_bounds = array<i64: 1, 512>}, {transform_indices = @transform_1, window_bounds = array<i64: 1, 512>}, {transform_indices = @transform_2, window_bounds = array<i64: 1, 512>}]} {
    %c0 = arith.constant 0 : index
    %c0_0 = arith.constant 0 : index
    %0 = vector.load %arg1[%c0, %c0_0] : memref<1x512xf32, #tpu.memory_space<vmem>>, vector<1x512xf32>
    %c0_1 = arith.constant 0 : index
    %c0_2 = arith.constant 0 : index
    %1 = vector.load %arg2[%c0_1, %c0_2] : memref<1x512xf32, #tpu.memory_space<vmem>>, vector<1x512xf32>
    %2 = arith.mulf %1, %0 : vector<1x512xf32>
    %cst = arith.constant 0.000000e+00 : f32
    %3 = vector.broadcast %cst : f32 to vector<1x512xf32>
    %4 = arith.subf %3, %2 : vector<1x512xf32>
    %5 = math.exp %4 : vector<1x512xf32>
    %cst_3 = arith.constant 1.000000e+00 : f32
    %6 = vector.broadcast %cst_3 : f32 to vector<1x512xf32>
    %7 = arith.addf %6, %5 : vector<1x512xf32>
    %cst_4 = arith.constant 1.000000e+00 : f32
    %8 = vector.broadcast %cst_4 : f32 to vector<1x512xf32>
    %9 = arith.divf %8, %7 : vector<1x512xf32>
    %c0_5 = arith.constant 0 : index
    %c0_6 = arith.constant 0 : index
    %10 = vector.load %arg3[%c0_5, %c0_6] : memref<1x512xf32, #tpu.memory_space<vmem>>, vector<1x512xf32>
    tpu.vector_store %arg3[%c0_5, %c0_6], %9 {strides = array<i32>} : memref<1x512xf32, #tpu.memory_space<vmem>>, vector<1x512xf32>,
    return
  }
  func.func @transform_0(%arg0: i32) -> (i32, i32) {
    %c0_i32 = arith.constant 0 : i32
    %c0_i32_0 = arith.constant 0 : i32
    %c0_i32_1 = arith.constant 0 : i32
    return %c0_i32, %c0_i32_0 : i32, i32
  }
  func.func @transform_1(%arg0: i32) -> (i32, i32) {
    %c0_i32 = arith.constant 0 : i32
    %c0_i32_0 = arith.constant 0 : i32
    return %arg0, %c0_i32 : i32, i32
  }
  func.func @transform_2(%arg0: i32) -> (i32, i32) {
    %c0_i32 = arith.constant 0 : i32
    %c0_i32_0 = arith.constant 0 : i32
    return %arg0, %c0_i32 : i32, i32
  }
}

</mosaic_0001>

<llo_original>
// kernel: tile.8
$region0: #{tile.8}
  #allocation0 [shape = 's32[1]{0}', space=sflag, size = 0x4, scoped, tag = 'scoped memory for tile.8']
  %s0 = inlined_call_operand.vmem [shape: f32[32], index: 0, kind: input, shape index: {}]
  %s1 = inlined_call_operand.vmem [shape: f32[16,32], index: 1, kind: output, shape index: {}]
  // Predicated region
  $region2: #{tile.8} parent=0 // pred_check
    _
  $region3: #{tile.8} parent=0 // pred_check_branch
    %3 = sbr.rel (0) target = $region5
  $region4: #{tile.8} parent=0 // pred_region
    _
  $region5: #{tile.8} parent=0 // pred_fallthru
    _
  %v4 = vld [vmem:[%s0] ss:$0 sm:$0xff]
  %5 = vst [vmem:[%s1] sm:$0xff] %v4
  %s6 = scalar_lea.vmem %s1, 8
  %7 = vst [vmem:[%s6] sm:$0xff] %v4

// kernel: tile.9
$region0: #{tile.9}
  %s0 = inlined_call_operand.vmem [shape: f32[16,32], index: 0, kind: input, shape index: {}]
  %s1 = inlined_call_operand.vmem [shape: f32[1,512], index: 1, kind: output, shape index: {}]
  $region1: #{tile.9} parent=0
    #allocation0 [shape = 'u8[16384]{0}', space=vmem, size = 0x4000, scoped, tag = 'scoped mem for output reshape']
    %v2 = vld [vmem:[%s0] ss:$4 sm:$0xf]
    %vm3 = vcmask 261120
    %4 = vst.msk [vmem:[#allocation0] ss:$8 sm:$0xf] %vm3, %v2
    %s5 = scalar_lea.vmem %s0, 3
    %v6 = vld [vmem:[%s5] ss:$4 sm:$0xf]
    %7 = vrot.lane.b32.xlu0 %v6, 96
    %v8 = vpop.permute.xlu0 %7
    %vm9 = vcmask 1048320
    %10 = vst.msk [vmem:[#allocation0] ss:$8 sm:$0xf] %vm9, %v8
    %s11 = scalar_lea.vmem %s0, 2
    %v12 = vld [vmem:[%s11] ss:$4 sm:$0xf]
    %13 = vrot.lane.b32.xlu0 %v12, 64
    %v14 = vpop.permute.xlu0 %13
    %vm15 = vcmask 785920
    %16 = vst.msk [vmem:[#allocation0] ss:$8 sm:$0xf] %vm15, %v14
    %s17 = scalar_lea.vmem %s0, 1
    %v18 = vld [vmem:[%s17] ss:$4 sm:$0xf]
    %19 = vrot.lane.b32.xlu0 %v18, 32
    %v20 = vpop.permute.xlu0 %19
    %vm21 = vcmask 523520
    %22 = vst.msk [vmem:[#allocation0] ss:$8 sm:$0xf] %vm21, %v20
    %s24 = sshllo.u32 0, 1
    %v26 = vld [vmem:[#allocation0] sm:%s24]
    %s27 = sshllo.u32 0, 1
    %28 = vst [vmem:[%s1] sm:%s27] %v26
    %s29 = scalar_lea.vmem [#allocation0], 8
    %v30 = vld [vmem:[%s29] sm:%s24]
    %s31 = sshllo.u32 0, 1
    %s32 = scalar_lea.vmem %s1, 1
    %33 = vst [vmem:[%s32] sm:%s31] %v30
    %s34 = scalar_lea.vmem [#allocation0], 16
    %v35 = vld [vmem:[%s34] sm:%s24]
    %s36 = sshllo.u32 0, 1
    %s37 = smul.addr 1, 2
    %s38 = scalar_lea.vmem %s1, %s37
    %39 = vst [vmem:[%s38] sm:%s36] %v35
    %s40 = scalar_lea.vmem [#allocation0], 24
    %v41 = vld [vmem:[%s40] sm:%s24]
    %s42 = sshllo.u32 0, 1
    %s43 = smul.addr 1, 3
    %s44 = scalar_lea.vmem %s1, %s43
    %45 = vst [vmem:[%s44] sm:%s42] %v41

// kernel: learnable_sigmoid_1d.1
$region0: #{learnable_sigmoid_1d.1}
  #allocation0 [shape = 'u32[]', space=smem, size = 0x4, offset = 0x4, fixed_abs, tag = 'smem constant byte address 0x4 - core index']
  #allocation1 [shape = 'u32[144,128]{1,0:T(1,128)}', space=vmem, size = 0x12000, scoped, tag = 'internal scratch']
  %s0 = inlined_call_operand.vmem [shape: f32[1,512], index: 0, kind: input, shape index: {}]
  %s1 = inlined_call_operand.vmem [shape: f32[1,512], index: 1, kind: input, shape index: {}]
  %s2 = inlined_call_operand.vmem [shape: f32[1,512], index: 2, kind: output, shape index: {}]
  %s3 = sld [smem:[#allocation0]]
  $region18: #{learnable_sigmoid_1d.1} parent=0
    _
  %s5 = ssub.s32 1, %s3
  %s6 = scalar_select 0, %s5, %s3
  // Predicated region
  $region2: #{learnable_sigmoid_1d.1} parent=0 // pred_check
    _
  $region3: #{learnable_sigmoid_1d.1} parent=0 // pred_check_branch
    %8 = sbr.rel (0) target = $region5
  $region4: #{learnable_sigmoid_1d.1} parent=0 // pred_region
    _
  $region5: #{learnable_sigmoid_1d.1} parent=0 // pred_fallthru
    _
  // Predicated region
  $region6: #{learnable_sigmoid_1d.1} parent=0 // pred_check
    _
  $region7: #{learnable_sigmoid_1d.1} parent=0 // pred_check_branch
    %10 = sbr.rel (0) target = $region9
  $region8: #{learnable_sigmoid_1d.1} parent=0 // pred_region
    _
  $region9: #{learnable_sigmoid_1d.1} parent=0 // pred_fallthru
    _
  %v11 = vld [vmem:[%s0] sm:$0xf]
  %v12 = vld [vmem:[%s1] sm:$0xf]
  %v13 = vmul.f32 %v12, %v11
  %v14 = vsub.f32 0.0, %v13
  %v15 = vmul.f32 %v14, 1.442695
  %v16 = vpow.pop %v15
  %v17 = vadd.f32 %v16, 1.0
  %v18 = vrcp.pop %v17
  %v19 = vmul.f32 1.0, %v18
  %v20 = vlaneseq
  %vm21 = vcmp.ge.s32.totalorder %v20, 0
  %vm22 = vcmp.lt.s32.totalorder %v20, 512
  %vm23 = vmand %vm21, %vm22
  %24 = vst.msk [vmem:[%s2] sm:$0xf] %vm23, %v19
  // Predicated region
  $region10: #{learnable_sigmoid_1d.1} parent=0 // pred_check
    _
  $region11: #{learnable_sigmoid_1d.1} parent=0 // pred_check_branch
    %26 = sbr.rel (0) target = $region13
  $region12: #{learnable_sigmoid_1d.1} parent=0 // pred_region
    _
  $region13: #{learnable_sigmoid_1d.1} parent=0 // pred_fallthru
    _
  // Predicated region
  $region14: #{learnable_sigmoid_1d.1} parent=0 // pred_check
    _
  $region15: #{learnable_sigmoid_1d.1} parent=0 // pred_check_branch
    %28 = sbr.rel (0) target = $region17
  $region16: #{learnable_sigmoid_1d.1} parent=0 // pred_region
    _
  $region17: #{learnable_sigmoid_1d.1} parent=0 // pred_fallthru
    _

</llo_original>
